<compile_context>
chip_gen: v6e
topology: v6e:2x2x1
jax: 0.10.0
libtpu: 0.0.40
codegen_flags: <defaults>
</compile_context>

<pallas_src>
import jax
import jax.numpy as jnp
from jax.experimental import pallas as pl
from jax.experimental.pallas import tpu as pltpu


def _round_up(x, m):
    return ((x + m - 1) // m) * m


def _mlp_kernel(x_ref, w1_ref, b1_ref, w2_ref, b2_ref, w3_ref, b3_ref, o_ref):
    x = x_ref[...]

    # hidden = sigmoid(x @ W1 + b1)      (sigmoid via EUP tanh)
    h = jnp.dot(x, w1_ref[...], preferred_element_type=jnp.float32) + b1_ref[...]
    h = 0.5 * (jnp.tanh(0.5 * h) + 1.0)

    # hidden2 = sigmoid(h @ W2 + b2)
    h = jnp.dot(h, w2_ref[...], preferred_element_type=jnp.float32) + b2_ref[...]
    h = 0.5 * (jnp.tanh(0.5 * h) + 1.0)

    # out = h @ W3 + b3   (no activation; bias folded into the store)
    o_ref[...] = (jnp.dot(h, w3_ref[...], preferred_element_type=jnp.float32)
                  + b3_ref[...]).astype(o_ref.dtype)


def mlp_forward(x, w1, b1, w2, b2, w3, b3, *, tb=512):
    """x: [B, n_feature]; w_i: [in, out]; b_i: [out]. Returns [B, n_output] (float32)."""
    B, F = x.shape
    H = w1.shape[1]
    O = w3.shape[1]

    # Lane-dense padding: last dims to multiples of 128.
    Fp = _round_up(F, 128)
    Hp = _round_up(H, 128)
    Op = _round_up(O, 128)

    # Batch tile: multiple of 8 sublanes, capped at `tb`; pad batch to a multiple of it.
    TB = min(_round_up(tb, 8), _round_up(B, 8))
    Bp = _round_up(B, TB)

    f32 = jnp.float32
    xp = jnp.zeros((Bp, Fp), f32).at[:B, :F].set(x.astype(f32))
    w1p = jnp.zeros((Fp, Hp), f32).at[:F, :H].set(w1.astype(f32))
    w2p = jnp.zeros((Hp, Hp), f32).at[:H, :H].set(w2.astype(f32))
    w3p = jnp.zeros((Hp, Op), f32).at[:H, :O].set(w3.astype(f32))
    b1p = jnp.zeros((1, Hp), f32).at[0, :H].set(b1.astype(f32))
    b2p = jnp.zeros((1, Hp), f32).at[0, :H].set(b2.astype(f32))
    b3p = jnp.zeros((1, Op), f32).at[0, :O].set(b3.astype(f32))
    # TODO(synk): on v6e/v7x, bf16 weights/activations into the MXU would halve HBM
    # traffic; kept fp32 here to preserve the module's exact numerics.

    grid = (Bp // TB,)

    def resident(shape):
        return pl.BlockSpec(shape, lambda i: (0, 0))

    # Advisory cost estimate for XLA scheduling around the custom call.
    flops = 2 * Bp * (Fp * Hp + Hp * Hp + Hp * Op)
    transcendentals = 2 * Bp * Hp
    bytes_accessed = 4 * (Bp * Fp + Fp * Hp + Hp * Hp + Hp * Op + 2 * Hp + Op + Bp * Op)

    # VMEM budget: double-buffered x/out tiles + resident weights/biases + activation
    # temps, with 2x headroom, clamped to the v7x per-TC VMEM (64 MiB).
    est_vmem = 4 * (2 * (Fp * Hp + Hp * Hp + Hp * Op + 2 * Hp + Op)
                    + 2 * TB * (Fp + Op)
                    + 3 * TB * Hp)
    vmem_limit = int(min(max(2 * est_vmem, 16 * 2**20), 64 * 2**20))

    out_p = pl.pallas_call(
        _mlp_kernel,
        out_shape=jax.ShapeDtypeStruct((Bp, Op), f32),
        grid_spec=pltpu.PrefetchScalarGridSpec(
            num_scalar_prefetch=0,
            grid=grid,
            in_specs=[
                pl.BlockSpec((TB, Fp), lambda i: (i, 0)),  # x: tiled over batch
                resident((Fp, Hp)),                        # W1 (VMEM-resident)
                resident((1, Hp)),                         # b1
                resident((Hp, Hp)),                        # W2
                resident((1, Hp)),                         # b2
                resident((Hp, Op)),                        # W3
                resident((1, Op)),                         # b3
            ],
            out_specs=pl.BlockSpec((TB, Op), lambda i: (i, 0)),
        ),
        compiler_params=pltpu.CompilerParams(
            dimension_semantics=("parallel",),
            vmem_limit_bytes=vmem_limit,
        ),
        cost_estimate=pl.CostEstimate(
            flops=flops,
            transcendentals=transcendentals,
            bytes_accessed=bytes_accessed,
        ),
    )(xp, w1p, b1p, w2p, b2p, w3p, b3p)

    return out_p[:B, :O]


def init_params(key, n_feature, n_hidden, n_output):
    """Deterministic init mimicking torch.nn.Linear (uniform in +/- 1/sqrt(fan_in)).
    Weights are returned already transposed to [in, out] layout."""
    ks = jax.random.split(key, 6)

    def linear(kw, kb, fan_in, fan_out):
        bound = 1.0 / jnp.sqrt(fan_in)
        w = jax.random.uniform(kw, (fan_in, fan_out), jnp.float32, -bound, bound)
        b = jax.random.uniform(kb, (fan_out,), jnp.float32, -bound, bound)
        return w, b

    w1, b1 = linear(ks[0], ks[1], n_feature, n_hidden)
    w2, b2 = linear(ks[2], ks[3], n_hidden, n_hidden)
    w3, b3 = linear(ks[4], ks[5], n_hidden, n_output)
    return w1, b1, w2, b2, w3, b3


if __name__ == "__main__":
    key = jax.random.PRNGKey(0)
    kx, kp = jax.random.split(key)

    batch = 8
    n_feature, n_hidden, n_output = 16, 32, 4

    x = jax.random.normal(kx, (batch, n_feature), jnp.float32)
    params = init_params(kp, n_feature, n_hidden, n_output)

    out = mlp_forward(x, *params)
    out = jax.block_until_ready(out)

    # Reference check in plain JAX (same math as the PyTorch module).
    w1, b1, w2, b2, w3, b3 = params
    ref = jax.nn.sigmoid(x @ w1 + b1)
    ref = jax.nn.sigmoid(ref @ w2 + b2)
    ref = ref @ w3 + b3
    assert out.shape == (batch, n_output)
    assert jnp.allclose(out, ref, atol=1e-5, rtol=1e-5)

    print("KERNEL_OK")
</pallas_src>

<mosaic_0001>
module attributes {stable_mosaic.version = 11 : i64} {
  func.func @_mlp_kernel(%arg0: i32, %arg1: memref<8x128xf32, #tpu.memory_space<vmem>>, %arg2: memref<128x128xf32, #tpu.memory_space<vmem>>, %arg3: memref<1x128xf32, #tpu.memory_space<vmem>>, %arg4: memref<128x128xf32, #tpu.memory_space<vmem>>, %arg5: memref<1x128xf32, #tpu.memory_space<vmem>>, %arg6: memref<128x128xf32, #tpu.memory_space<vmem>>, %arg7: memref<1x128xf32, #tpu.memory_space<vmem>>, %arg8: memref<8x128xf32, #tpu.memory_space<vmem>>) attributes {dimension_semantics = [#tpu.dimension_semantics<parallel>], iteration_bounds = array<i64: 1>, scalar_prefetch = 0 : i64, scratch_operands = 0 : i64, tpu.core_type = #tpu.core_type<tc>, window_params = [{transform_indices = @transform_0, window_bounds = array<i64: 8, 128>}, {pipeline_mode = #tpu.pipeline_mode<synchronous>, transform_indices = @transform_1, window_bounds = array<i64: 128, 128>}, {pipeline_mode = #tpu.pipeline_mode<synchronous>, transform_indices = @transform_2, window_bounds = array<i64: 1, 128>}, {pipeline_mode = #tpu.pipeline_mode<synchronous>, transform_indices = @transform_3, window_bounds = array<i64: 128, 128>}, {pipeline_mode = #tpu.pipeline_mode<synchronous>, transform_indices = @transform_4, window_bounds = array<i64: 1, 128>}, {pipeline_mode = #tpu.pipeline_mode<synchronous>, transform_indices = @transform_5, window_bounds = array<i64: 128, 128>}, {pipeline_mode = #tpu.pipeline_mode<synchronous>, transform_indices = @transform_6, window_bounds = array<i64: 1, 128>}, {transform_indices = @transform_7, window_bounds = array<i64: 8, 128>}]} {
    %c0 = arith.constant 0 : index
    %c0_0 = arith.constant 0 : index
    %0 = vector.load %arg1[%c0, %c0_0] : memref<8x128xf32, #tpu.memory_space<vmem>>, vector<8x128xf32>
    %c0_1 = arith.constant 0 : index
    %c0_2 = arith.constant 0 : index
    %1 = vector.load %arg2[%c0_1, %c0_2] : memref<128x128xf32, #tpu.memory_space<vmem>>, vector<128x128xf32>
    %cst = arith.constant dense<0.000000e+00> : vector<8x128xf32>
    %2 = tpu.matmul %0, %1, %cst {dimension_numbers = #tpu.dot_dimension_numbers<[1], [0], [0], [1], [0, 0, 1, 1], [], []>} : vector<8x128xf32>, vector<128x128xf32>, vector<8x128xf32> -> vector<8x128xf32>
    %c0_3 = arith.constant 0 : index
    %c0_4 = arith.constant 0 : index
    %3 = vector.load %arg3[%c0_3, %c0_4] : memref<1x128xf32, #tpu.memory_space<vmem>>, vector<1x128xf32>
    %4 = vector.broadcast %3 : vector<1x128xf32> to vector<8x128xf32>
    %5 = arith.addf %2, %4 : vector<8x128xf32>
    %cst_5 = arith.constant 5.000000e-01 : f32
    %6 = vector.broadcast %cst_5 : f32 to vector<8x128xf32>
    %7 = arith.mulf %6, %5 : vector<8x128xf32>
    %8 = math.tanh %7 : vector<8x128xf32>
    %cst_6 = arith.constant 1.000000e+00 : f32
    %9 = vector.broadcast %cst_6 : f32 to vector<8x128xf32>
    %10 = arith.addf %8, %9 : vector<8x128xf32>
    %cst_7 = arith.constant 5.000000e-01 : f32
    %11 = vector.broadcast %cst_7 : f32 to vector<8x128xf32>
    %12 = arith.mulf %11, %10 : vector<8x128xf32>
    %c0_8 = arith.constant 0 : index
    %c0_9 = arith.constant 0 : index
    %13 = vector.load %arg4[%c0_8, %c0_9] : memref<128x128xf32, #tpu.memory_space<vmem>>, vector<128x128xf32>
    %cst_10 = arith.constant dense<0.000000e+00> : vector<8x128xf32>
    %14 = tpu.matmul %12, %13, %cst_10 {dimension_numbers = #tpu.dot_dimension_numbers<[1], [0], [0], [1], [0, 0, 1, 1], [], []>} : vector<8x128xf32>, vector<128x128xf32>, vector<8x128xf32> -> vector<8x128xf32>
    %c0_11 = arith.constant 0 : index
    %c0_12 = arith.constant 0 : index
    %15 = vector.load %arg5[%c0_11, %c0_12] : memref<1x128xf32, #tpu.memory_space<vmem>>, vector<1x128xf32>
    %16 = vector.broadcast %15 : vector<1x128xf32> to vector<8x128xf32>
    %17 = arith.addf %14, %16 : vector<8x128xf32>
    %cst_13 = arith.constant 5.000000e-01 : f32
    %18 = vector.broadcast %cst_13 : f32 to vector<8x128xf32>
    %19 = arith.mulf %18, %17 : vector<8x128xf32>
    %20 = math.tanh %19 : vector<8x128xf32>
    %cst_14 = arith.constant 1.000000e+00 : f32
    %21 = vector.broadcast %cst_14 : f32 to vector<8x128xf32>
    %22 = arith.addf %20, %21 : vector<8x128xf32>
    %cst_15 = arith.constant 5.000000e-01 : f32
    %23 = vector.broadcast %cst_15 : f32 to vector<8x128xf32>
    %24 = arith.mulf %23, %22 : vector<8x128xf32>
    %c0_16 = arith.constant 0 : index
    %c0_17 = arith.constant 0 : index
    %25 = vector.load %arg6[%c0_16, %c0_17] : memref<128x128xf32, #tpu.memory_space<vmem>>, vector<128x128xf32>
    %cst_18 = arith.constant dense<0.000000e+00> : vector<8x128xf32>
    %26 = tpu.matmul %24, %25, %cst_18 {dimension_numbers = #tpu.dot_dimension_numbers<[1], [0], [0], [1], [0, 0, 1, 1], [], []>} : vector<8x128xf32>, vector<128x128xf32>, vector<8x128xf32> -> vector<8x128xf32>
    %c0_19 = arith.constant 0 : index
    %c0_20 = arith.constant 0 : index
    %27 = vector.load %arg7[%c0_19, %c0_20] : memref<1x128xf32, #tpu.memory_space<vmem>>, vector<1x128xf32>
    %28 = vector.broadcast %27 : vector<1x128xf32> to vector<8x128xf32>
    %29 = arith.addf %26, %28 : vector<8x128xf32>
    %c0_21 = arith.constant 0 : index
    %c0_22 = arith.constant 0 : index
    %30 = vector.load %arg8[%c0_21, %c0_22] : memref<8x128xf32, #tpu.memory_space<vmem>>, vector<8x128xf32>
    tpu.vector_store %arg8[%c0_21, %c0_22], %29 {strides = array<i32>} : memref<8x128xf32, #tpu.memory_space<vmem>>, vector<8x128xf32>,
    return
  }
  func.func @transform_0(%arg0: i32) -> (i32, i32) {
    %c0_i32 = arith.constant 0 : i32
    %c0_i32_0 = arith.constant 0 : i32
    return %arg0, %c0_i32 : i32, i32
  }
  func.func @transform_1(%arg0: i32) -> (i32, i32) {
    %c0_i32 = arith.constant 0 : i32
    %c0_i32_0 = arith.constant 0 : i32
    %c0_i32_1 = arith.constant 0 : i32
    return %c0_i32, %c0_i32_0 : i32, i32
  }
  func.func @transform_2(%arg0: i32) -> (i32, i32) {
    %c0_i32 = arith.constant 0 : i32
    %c0_i32_0 = arith.constant 0 : i32
    %c0_i32_1 = arith.constant 0 : i32
    return %c0_i32, %c0_i32_0 : i32, i32
  }
  func.func @transform_3(%arg0: i32) -> (i32, i32) {
    %c0_i32 = arith.constant 0 : i32
    %c0_i32_0 = arith.constant 0 : i32
    %c0_i32_1 = arith.constant 0 : i32
    return %c0_i32, %c0_i32_0 : i32, i32
  }
  func.func @transform_4(%arg0: i32) -> (i32, i32) {
    %c0_i32 = arith.constant 0 : i32
    %c0_i32_0 = arith.constant 0 : i32
    %c0_i32_1 = arith.constant 0 : i32
    return %c0_i32, %c0_i32_0 : i32, i32
  }
  func.func @transform_5(%arg0: i32) -> (i32, i32) {
    %c0_i32 = arith.constant 0 : i32
    %c0_i32_0 = arith.constant 0 : i32
    %c0_i32_1 = arith.constant 0 : i32
    return %c0_i32, %c0_i32_0 : i32, i32
  }
  func.func @transform_6(%arg0: i32) -> (i32, i32) {
    %c0_i32 = arith.constant 0 : i32
    %c0_i32_0 = arith.constant 0 : i32
    %c0_i32_1 = arith.constant 0 : i32
    return %c0_i32, %c0_i32_0 : i32, i32
  }
  func.func @transform_7(%arg0: i32) -> (i32, i32) {
    %c0_i32 = arith.constant 0 : i32
    %c0_i32_0 = arith.constant 0 : i32
    return %arg0, %c0_i32 : i32, i32
  }
}

</mosaic_0001>

<llo_original>
// kernel: tpu_custom_call.1
$region0: #{tpu_custom_call.1}
  #allocation0 [shape = 'u32[]', space=smem, size = 0x4, offset = 0x4, fixed_abs, tag = 'smem constant byte address 0x4 - core index']
  #allocation1 [shape = 'u32[144,128]{1,0:T(1,128)}', space=vmem, size = 0x12000, scoped, tag = 'internal scratch']
  %s0 = inlined_call_operand.hbm [shape: f32[8,128], index: 0, kind: input, shape index: {}]
  %s1 = inlined_call_operand.hbm [shape: f32[128,128], index: 1, kind: input, shape index: {}]
  %s2 = inlined_call_operand.vmem [shape: f32[1,128], index: 2, kind: input, shape index: {}]
  %s3 = inlined_call_operand.hbm [shape: f32[128,128], index: 3, kind: input, shape index: {}]
  %s4 = inlined_call_operand.vmem [shape: f32[1,128], index: 4, kind: input, shape index: {}]
  %s5 = inlined_call_operand.hbm [shape: f32[128,128], index: 5, kind: input, shape index: {}]
  %s6 = inlined_call_operand.vmem [shape: f32[1,128], index: 6, kind: input, shape index: {}]
  %s7 = inlined_call_operand.hbm [shape: f32[8,128], index: 7, kind: output, shape index: {}]
  %s8 = sld [smem:[#allocation0]]
  $region54: #{tpu_custom_call.1} parent=0
    _
  %s10 = ssub.s32 1, %s8
  %s11 = scalar_select 0, %s10, %s8
  $region1: #{tpu_custom_call.1} parent=0
    #allocation2 [shape = 'u8[4096]{0}', space=vmem, size = 0x1000, scoped, tag = 'input window, operand 0, single buffered']
    #allocation3 [shape = 's32[1]{0}', space=sflag, size = 0x4, scoped, tag = 'scoped memory for tpu_custom_call.1']
    #allocation4 [shape = 's32[1]{0}', space=sflag, size = 0x4, scoped, tag = 'scoped memory for tpu_custom_call.1']
    #allocation5 [shape = 'u8[65536]{0}', space=vmem, size = 0x10000, scoped, tag = 'input window, operand 1, single buffered']
    #allocation6 [shape = 's32[1]{0}', space=sflag, size = 0x4, scoped, tag = 'scoped memory for tpu_custom_call.1']
    #allocation7 [shape = 'u8[65536]{0}', space=vmem, size = 0x10000, scoped, tag = 'input window, operand 3, single buffered']
    #allocation8 [shape = 'u8[65536]{0}', space=vmem, size = 0x10000, scoped, tag = 'input window, operand 5, single buffered']
    #allocation9 [shape = 's32[1]{0}', space=sflag, size = 0x4, scoped, tag = 'scoped memory for tpu_custom_call.1']
    #allocation10 [shape = 'u8[4096]{0}', space=vmem, size = 0x1000, scoped, tag = 'output window, operand 0, single buffered']
    %12 = vsyncpa [#allocation3], 0
    %13 = vsyncpa [#allocation6], 0
    %14 = vsyncpa [#allocation9], 0
    %15 = vsyncpa [#allocation4], 0
    // Predicated region
    $region2: #{tpu_custom_call.1} parent=1 // pred_check
      _
    $region3: #{tpu_custom_call.1} parent=1 // pred_check_branch
      %17 = sbr.rel (0) target = $region5
    $region4: #{tpu_custom_call.1} parent=1 // pred_region
      %s19 = ssub.s32 128, 128
      %20 = vsyncadd [#allocation3], %s19
      %s22 = sshll.u32 [#allocation2], 4
      %s23 = int_to_ptr.vmem [resolvable:$true] %s22
      %25 = dma.hbm_to_vmem [thread:$0]  %s0, 128, %s23, [#allocation3]
    $region5: #{tpu_custom_call.1} parent=1 // pred_fallthru
      _
    // Predicated region
    $region6: #{tpu_custom_call.1} parent=1 // pred_check
      _
    $region7: #{tpu_custom_call.1} parent=1 // pred_check_branch
      %27 = sbr.rel (0) target = $region9
    $region8: #{tpu_custom_call.1} parent=1 // pred_region
      %s29 = ssub.s32 2048, 2048
      %30 = vsyncadd [#allocation6], %s29
      %s31 = sshll.u32 [#allocation5], 4
      %s32 = int_to_ptr.vmem [resolvable:$true] %s31
      %37 = dma.hbm_to_vmem [thread:$0]  %s1, 2048, %s32, [#allocation6], 128, 128, 8
    $region9: #{tpu_custom_call.1} parent=1 // pred_fallthru
      _
    // Predicated region
    $region10: #{tpu_custom_call.1} parent=1 // pred_check
      _
    $region11: #{tpu_custom_call.1} parent=1 // pred_check_branch
      %39 = sbr.rel (0) target = $region13
    $region12: #{tpu_custom_call.1} parent=1 // pred_region
      _
    $region13: #{tpu_custom_call.1} parent=1 // pred_fallthru
      _
    // Predicated region
    $region14: #{tpu_custom_call.1} parent=1 // pred_check
      _
    $region15: #{tpu_custom_call.1} parent=1 // pred_check_branch
      %41 = sbr.rel (0) target = $region17
    $region16: #{tpu_custom_call.1} parent=1 // pred_region
      %s43 = ssub.s32 2048, 2048
      %44 = vsyncadd [#allocation6], %s43
      %s45 = sshll.u32 [#allocation7], 4
      %s46 = int_to_ptr.vmem [resolvable:$true] %s45
      %51 = dma.hbm_to_vmem [thread:$0]  %s3, 2048, %s46, [#allocation6], 128, 128, 8
    $region17: #{tpu_custom_call.1} parent=1 // pred_fallthru
      _
    // Predicated region
    $region18: #{tpu_custom_call.1} parent=1 // pred_check
      _
    $region19: #{tpu_custom_call.1} parent=1 // pred_check_branch
      %53 = sbr.rel (0) target = $region21
    $region20: #{tpu_custom_call.1} parent=1 // pred_region
      _
    $region21: #{tpu_custom_call.1} parent=1 // pred_fallthru
      _
    // Predicated region
    $region22: #{tpu_custom_call.1} parent=1 // pred_check
      _
    $region23: #{tpu_custom_call.1} parent=1 // pred_check_branch
      %55 = sbr.rel (0) target = $region25
    $region24: #{tpu_custom_call.1} parent=1 // pred_region
      %s57 = ssub.s32 2048, 2048
      %58 = vsyncadd [#allocation9], %s57
      %s59 = sshll.u32 [#allocation8], 4
      %s60 = int_to_ptr.vmem [resolvable:$true] %s59
      %65 = dma.hbm_to_vmem [thread:$0]  %s5, 2048, %s60, [#allocation9], 128, 128, 8
    $region25: #{tpu_custom_call.1} parent=1 // pred_fallthru
      _
    // Predicated region
    $region26: #{tpu_custom_call.1} parent=1 // pred_check
      _
    $region27: #{tpu_custom_call.1} parent=1 // pred_check_branch
      %67 = sbr.rel (0) target = $region29
    $region28: #{tpu_custom_call.1} parent=1 // pred_region
      _
    $region29: #{tpu_custom_call.1} parent=1 // pred_fallthru
      _
    // Predicated region
    $region30: #{tpu_custom_call.1} parent=1 // pred_check
      _
    $region31: #{tpu_custom_call.1} parent=1 // pred_check_branch
      %69 = sbr.rel (0) target = $region33
    $region32: #{tpu_custom_call.1} parent=1 // pred_region
      %70 = dma.done [#allocation3], 128
    $region33: #{tpu_custom_call.1} parent=1 // pred_fallthru
      _
    // Predicated region
    $region34: #{tpu_custom_call.1} parent=1 // pred_check
      _
    $region35: #{tpu_custom_call.1} parent=1 // pred_check_branch
      %72 = sbr.rel (0) target = $region37
    $region36: #{tpu_custom_call.1} parent=1 // pred_region
      %73 = dma.done [#allocation6], 2048
    $region37: #{tpu_custom_call.1} parent=1 // pred_fallthru
      _
    // Predicated region
    $region38: #{tpu_custom_call.1} parent=1 // pred_check
      _
    $region39: #{tpu_custom_call.1} parent=1 // pred_check_branch
      %75 = sbr.rel (0) target = $region41
    $region40: #{tpu_custom_call.1} parent=1 // pred_region
      %76 = dma.done [#allocation6], 2048
    $region41: #{tpu_custom_call.1} parent=1 // pred_fallthru
      _
    // Predicated region
    $region42: #{tpu_custom_call.1} parent=1 // pred_check
      _
    $region43: #{tpu_custom_call.1} parent=1 // pred_check_branch
      %78 = sbr.rel (0) target = $region45
    $region44: #{tpu_custom_call.1} parent=1 // pred_region
      %79 = dma.done [#allocation9], 2048
    $region45: #{tpu_custom_call.1} parent=1 // pred_fallthru
      _
    %v80 = vld [vmem:[#allocation2] sm:$0xff]
    %v81 = vld [vmem:[#allocation5] sm:$0xff]
    %v82 = vld [vmem:[#allocation5 + $0x8] sm:$0xff]
    %v83 = vld [vmem:[#allocation5 + $0x10] sm:$0xff]
    %v84 = vld [vmem:[#allocation5 + $0x18] sm:$0xff]
    %v85 = vld [vmem:[#allocation5 + $0x20] sm:$0xff]
    %v86 = vld [vmem:[#allocation5 + $0x28] sm:$0xff]
    %v87 = vld [vmem:[#allocation5 + $0x30] sm:$0xff]
    %v88 = vld [vmem:[#allocation5 + $0x38] sm:$0xff]
    %v89 = vld [vmem:[#allocation5 + $0x40] sm:$0xff]
    %v90 = vld [vmem:[#allocation5 + $0x48] sm:$0xff]
    %v91 = vld [vmem:[#allocation5 + $0x50] sm:$0xff]
    %v92 = vld [vmem:[#allocation5 + $0x58] sm:$0xff]
    %v93 = vld [vmem:[#allocation5 + $0x60] sm:$0xff]
    %v94 = vld [vmem:[#allocation5 + $0x68] sm:$0xff]
    %v95 = vld [vmem:[#allocation5 + $0x70] sm:$0xff]
    %v96 = vld [vmem:[#allocation5 + $0x78] sm:$0xff]
    %v97 = vld [vmem:[%s2] sm:$0x1]
    %v99 = vlaneseq
    %v100 = vshrl.u32 %v99, 7
    %v101 = vsub.s32 0, %v100
    %v102 = vrot.slane %v97, %v101
    %104 = vmatprep.subr.mxu0 0.0
    %105 = vmatpush1.msra.mxu0 %v96
    %106 = vmatprep.subr.mxu0 0.0
    %107 = vmatpush1.msra.mxu0 %v95
    %108 = vmatprep.subr.mxu0 0.0
    %109 = vmatpush1.msra.mxu0 %v94
    %110 = vmatprep.subr.mxu0 0.0
    %111 = vmatpush1.msra.mxu0 %v93
    %112 = vmatprep.subr.mxu0 0.0
    %113 = vmatpush1.msra.mxu0 %v92
    %114 = vmatprep.subr.mxu0 0.0
    %115 = vmatpush1.msra.mxu0 %v91
    %116 = vmatprep.subr.mxu0 0.0
    %117 = vmatpush1.msra.mxu0 %v90
    %118 = vmatprep.subr.mxu0 0.0
    %119 = vmatpush1.msra.mxu0 %v89
    %120 = vmatprep.subr.mxu0 0.0
    %121 = vmatpush1.msra.mxu0 %v88
    %122 = vmatprep.subr.mxu0 0.0
    %123 = vmatpush1.msra.mxu0 %v87
    %124 = vmatprep.subr.mxu0 0.0
    %125 = vmatpush1.msra.mxu0 %v86
    %126 = vmatprep.subr.mxu0 0.0
    %127 = vmatpush1.msra.mxu0 %v85
    %128 = vmatprep.subr.mxu0 0.0
    %129 = vmatpush1.msra.mxu0 %v84
    %130 = vmatprep.subr.mxu0 0.0
    %131 = vmatpush1.msra.mxu0 %v83
    %132 = vmatprep.subr.mxu0 0.0
    %133 = vmatpush1.msra.mxu0 %v82
    %134 = vmatprep.subr.mxu0 0.0
    %135 = vmatpush1.msra.mxu0 %v81
    %136 = vmatprep.subr.mxu0 0.0
    %137 = vmatpush2.msra.mxu0 0.0
    %138 = vmatprep.subr.mxu0 0.0
    %139 = vmatpush2.msra.mxu0 0.0
    %140 = vmatprep.subr.mxu0 0.0
    %141 = vmatpush2.msra.mxu0 0.0
    %142 = vmatprep.subr.mxu0 0.0
    %143 = vmatpush2.msra.mxu0 0.0
    %144 = vmatprep.subr.mxu0 0.0
    %145 = vmatpush2.msra.mxu0 0.0
    %146 = vmatprep.subr.mxu0 0.0
    %147 = vmatpush2.msra.mxu0 0.0
    %148 = vmatprep.subr.mxu0 0.0
    %149 = vmatpush2.msra.mxu0 0.0
    %150 = vmatprep.subr.mxu0 0.0
    %151 = vmatpush2.msra.mxu0 0.0
    %152 = vmatprep.subr.mxu0 0.0
    %153 = vmatpush2.msra.mxu0 0.0
    %154 = vmatprep.subr.mxu0 0.0
    %155 = vmatpush2.msra.mxu0 0.0
    %156 = vmatprep.subr.mxu0 0.0
    %157 = vmatpush2.msra.mxu0 0.0
    %158 = vmatprep.subr.mxu0 0.0
    %159 = vmatpush2.msra.mxu0 0.0
    %160 = vmatprep.subr.mxu0 0.0
    %161 = vmatpush2.msra.mxu0 0.0
    %162 = vmatprep.subr.mxu0 0.0
    %163 = vmatpush2.msra.mxu0 0.0
    %164 = vmatprep.subr.mxu0 0.0
    %165 = vmatpush2.msra.mxu0 0.0
    %166 = vmatprep.subr.mxu0 0.0
    %167 = vmatpush2.msra.mxu0 0.0
    %168 = vmatprep.mubr.f32.mxu0 0.0
    %169 = vmatmul.mubr.f32.gmra.mxu0 %v80
    %v170 = vpop.f32.mrf.mxu0
    %v171 = vadd.f32 %v102, %v170
    %v172 = vpop.f32.mrf.mxu0
    %173 = vdwg.mxu0
    %v174 = vmul.f32 %v171, 0.5
    %v175 = vtanh.pop %v174
    %v176 = vadd.f32 %v175, 1.0
    %v177 = vmul.f32 %v176, 0.5
    %v178 = vld [vmem:[#allocation7] sm:$0xff]
    %v179 = vld [vmem:[#allocation7 + $0x8] sm:$0xff]
    %v180 = vld [vmem:[#allocation7 + $0x10] sm:$0xff]
    %v181 = vld [vmem:[#allocation7 + $0x18] sm:$0xff]
    %v182 = vld [vmem:[#allocation7 + $0x20] sm:$0xff]
    %v183 = vld [vmem:[#allocation7 + $0x28] sm:$0xff]
    %v184 = vld [vmem:[#allocation7 + $0x30] sm:$0xff]
    %v185 = vld [vmem:[#allocation7 + $0x38] sm:$0xff]
    %v186 = vld [vmem:[#allocation7 + $0x40] sm:$0xff]
    %v187 = vld [vmem:[#allocation7 + $0x48] sm:$0xff]
    %v188 = vld [vmem:[#allocation7 + $0x50] sm:$0xff]
    %v189 = vld [vmem:[#allocation7 + $0x58] sm:$0xff]
    %v190 = vld [vmem:[#allocation7 + $0x60] sm:$0xff]
    %v191 = vld [vmem:[#allocation7 + $0x68] sm:$0xff]
    %v192 = vld [vmem:[#allocation7 + $0x70] sm:$0xff]
    %v193 = vld [vmem:[#allocation7 + $0x78] sm:$0xff]
    %v194 = vld [vmem:[%s4] sm:$0x1]
    %v196 = vlaneseq
    %v197 = vshrl.u32 %v196, 7
    %v198 = vsub.s32 0, %v197
    %v199 = vrot.slane %v194, %v198
    %201 = vmatprep.subr.mxu0 0.0
    %202 = vmatpush1.msra.mxu0 %v193
    %203 = vmatprep.subr.mxu0 0.0
    %204 = vmatpush1.msra.mxu0 %v192
    %205 = vmatprep.subr.mxu0 0.0
    %206 = vmatpush1.msra.mxu0 %v191
    %207 = vmatprep.subr.mxu0 0.0
    %208 = vmatpush1.msra.mxu0 %v190
    %209 = vmatprep.subr.mxu0 0.0
    %210 = vmatpush1.msra.mxu0 %v189
    %211 = vmatprep.subr.mxu0 0.0
    %212 = vmatpush1.msra.mxu0 %v188
    %213 = vmatprep.subr.mxu0 0.0
    %214 = vmatpush1.msra.mxu0 %v187
    %215 = vmatprep.subr.mxu0 0.0
    %216 = vmatpush1.msra.mxu0 %v186
    %217 = vmatprep.subr.mxu0 0.0
    %218 = vmatpush1.msra.mxu0 %v185
    %219 = vmatprep.subr.mxu0 0.0
    %220 = vmatpush1.msra.mxu0 %v184
    %221 = vmatprep.subr.mxu0 0.0
    %222 = vmatpush1.msra.mxu0 %v183
    %223 = vmatprep.subr.mxu0 0.0
    %224 = vmatpush1.msra.mxu0 %v182
    %225 = vmatprep.subr.mxu0 0.0
    %226 = vmatpush1.msra.mxu0 %v181
    %227 = vmatprep.subr.mxu0 0.0
    %228 = vmatpush1.msra.mxu0 %v180
    %229 = vmatprep.subr.mxu0 0.0
    %230 = vmatpush1.msra.mxu0 %v179
    %231 = vmatprep.subr.mxu0 0.0
    %232 = vmatpush1.msra.mxu0 %v178
    %233 = vmatprep.subr.mxu0 0.0
    %234 = vmatpush2.msra.mxu0 0.0
    %235 = vmatprep.subr.mxu0 0.0
    %236 = vmatpush2.msra.mxu0 0.0
    %237 = vmatprep.subr.mxu0 0.0
    %238 = vmatpush2.msra.mxu0 0.0
    %239 = vmatprep.subr.mxu0 0.0
    %240 = vmatpush2.msra.mxu0 0.0
    %241 = vmatprep.subr.mxu0 0.0
    %242 = vmatpush2.msra.mxu0 0.0
    %243 = vmatprep.subr.mxu0 0.0
    %244 = vmatpush2.msra.mxu0 0.0
    %245 = vmatprep.subr.mxu0 0.0
    %246 = vmatpush2.msra.mxu0 0.0
    %247 = vmatprep.subr.mxu0 0.0
    %248 = vmatpush2.msra.mxu0 0.0
    %249 = vmatprep.subr.mxu0 0.0
    %250 = vmatpush2.msra.mxu0 0.0
    %251 = vmatprep.subr.mxu0 0.0
    %252 = vmatpush2.msra.mxu0 0.0
    %253 = vmatprep.subr.mxu0 0.0
    %254 = vmatpush2.msra.mxu0 0.0
    %255 = vmatprep.subr.mxu0 0.0
    %256 = vmatpush2.msra.mxu0 0.0
    %257 = vmatprep.subr.mxu0 0.0
    %258 = vmatpush2.msra.mxu0 0.0
    %259 = vmatprep.subr.mxu0 0.0
    %260 = vmatpush2.msra.mxu0 0.0
    %261 = vmatprep.subr.mxu0 0.0
    %262 = vmatpush2.msra.mxu0 0.0
    %263 = vmatprep.subr.mxu0 0.0
    %264 = vmatpush2.msra.mxu0 0.0
    %265 = vmatprep.mubr.f32.mxu0 0.0
    %266 = vmatmul.mubr.f32.gmra.mxu0 %v177
    %v267 = vpop.f32.mrf.mxu0
    %v268 = vadd.f32 %v199, %v267
    %v269 = vpop.f32.mrf.mxu0
    %270 = vdwg.mxu0
    %v271 = vmul.f32 %v268, 0.5
    %v272 = vtanh.pop %v271
    %v273 = vadd.f32 %v272, 1.0
    %v274 = vmul.f32 %v273, 0.5
    %v275 = vld [vmem:[#allocation8] sm:$0xff]
    %v276 = vld [vmem:[#allocation8 + $0x8] sm:$0xff]
    %v277 = vld [vmem:[#allocation8 + $0x10] sm:$0xff]
    %v278 = vld [vmem:[#allocation8 + $0x18] sm:$0xff]
    %v279 = vld [vmem:[#allocation8 + $0x20] sm:$0xff]
    %v280 = vld [vmem:[#allocation8 + $0x28] sm:$0xff]
    %v281 = vld [vmem:[#allocation8 + $0x30] sm:$0xff]
    %v282 = vld [vmem:[#allocation8 + $0x38] sm:$0xff]
    %v283 = vld [vmem:[#allocation8 + $0x40] sm:$0xff]
    %v284 = vld [vmem:[#allocation8 + $0x48] sm:$0xff]
    %v285 = vld [vmem:[#allocation8 + $0x50] sm:$0xff]
    %v286 = vld [vmem:[#allocation8 + $0x58] sm:$0xff]
    %v287 = vld [vmem:[#allocation8 + $0x60] sm:$0xff]
    %v288 = vld [vmem:[#allocation8 + $0x68] sm:$0xff]
    %v289 = vld [vmem:[#allocation8 + $0x70] sm:$0xff]
    %v290 = vld [vmem:[#allocation8 + $0x78] sm:$0xff]
    %v291 = vld [vmem:[%s6] sm:$0x1]
    %v293 = vlaneseq
    %v294 = vshrl.u32 %v293, 7
    %v295 = vsub.s32 0, %v294
    %v296 = vrot.slane %v291, %v295
    %298 = vmatprep.subr.mxu0 0.0
    %299 = vmatpush1.msra.mxu0 %v290
    %300 = vmatprep.subr.mxu0 0.0
    %301 = vmatpush1.msra.mxu0 %v289
    %302 = vmatprep.subr.mxu0 0.0
    %303 = vmatpush1.msra.mxu0 %v288
    %304 = vmatprep.subr.mxu0 0.0
    %305 = vmatpush1.msra.mxu0 %v287
    %306 = vmatprep.subr.mxu0 0.0
    %307 = vmatpush1.msra.mxu0 %v286
    %308 = vmatprep.subr.mxu0 0.0
    %309 = vmatpush1.msra.mxu0 %v285
    %310 = vmatprep.subr.mxu0 0.0
    %311 = vmatpush1.msra.mxu0 %v284
    %312 = vmatprep.subr.mxu0 0.0
    %313 = vmatpush1.msra.mxu0 %v283
    %314 = vmatprep.subr.mxu0 0.0
    %315 = vmatpush1.msra.mxu0 %v282
    %316 = vmatprep.subr.mxu0 0.0
    %317 = vmatpush1.msra.mxu0 %v281
    %318 = vmatprep.subr.mxu0 0.0
    %319 = vmatpush1.msra.mxu0 %v280
    %320 = vmatprep.subr.mxu0 0.0
    %321 = vmatpush1.msra.mxu0 %v279
    %322 = vmatprep.subr.mxu0 0.0
    %323 = vmatpush1.msra.mxu0 %v278
    %324 = vmatprep.subr.mxu0 0.0
    %325 = vmatpush1.msra.mxu0 %v277
    %326 = vmatprep.subr.mxu0 0.0
    %327 = vmatpush1.msra.mxu0 %v276
    %328 = vmatprep.subr.mxu0 0.0
    %329 = vmatpush1.msra.mxu0 %v275
    %330 = vmatprep.subr.mxu0 0.0
    %331 = vmatpush2.msra.mxu0 0.0
    %332 = vmatprep.subr.mxu0 0.0
    %333 = vmatpush2.msra.mxu0 0.0
    %334 = vmatprep.subr.mxu0 0.0
    %335 = vmatpush2.msra.mxu0 0.0
    %336 = vmatprep.subr.mxu0 0.0
    %337 = vmatpush2.msra.mxu0 0.0
    %338 = vmatprep.subr.mxu0 0.0
    %339 = vmatpush2.msra.mxu0 0.0
    %340 = vmatprep.subr.mxu0 0.0
    %341 = vmatpush2.msra.mxu0 0.0
    %342 = vmatprep.subr.mxu0 0.0
    %343 = vmatpush2.msra.mxu0 0.0
    %344 = vmatprep.subr.mxu0 0.0
    %345 = vmatpush2.msra.mxu0 0.0
    %346 = vmatprep.subr.mxu0 0.0
    %347 = vmatpush2.msra.mxu0 0.0
    %348 = vmatprep.subr.mxu0 0.0
    %349 = vmatpush2.msra.mxu0 0.0
    %350 = vmatprep.subr.mxu0 0.0
    %351 = vmatpush2.msra.mxu0 0.0
    %352 = vmatprep.subr.mxu0 0.0
    %353 = vmatpush2.msra.mxu0 0.0
    %354 = vmatprep.subr.mxu0 0.0
    %355 = vmatpush2.msra.mxu0 0.0
    %356 = vmatprep.subr.mxu0 0.0
    %357 = vmatpush2.msra.mxu0 0.0
    %358 = vmatprep.subr.mxu0 0.0
    %359 = vmatpush2.msra.mxu0 0.0
    %360 = vmatprep.subr.mxu0 0.0
    %361 = vmatpush2.msra.mxu0 0.0
    %362 = vmatprep.mubr.f32.mxu0 0.0
    %363 = vmatmul.mubr.f32.gmra.mxu0 %v274
    %v364 = vpop.f32.mrf.mxu0
    %v365 = vadd.f32 %v296, %v364
    %v366 = vpop.f32.mrf.mxu0
    %367 = vdwg.mxu0
    %368 = vst [vmem:[#allocation10] sm:$0xff] %v365
    // Predicated region
    $region46: #{tpu_custom_call.1} parent=1 // pred_check
      _
    $region47: #{tpu_custom_call.1} parent=1 // pred_check_branch
      %370 = sbr.rel (0) target = $region49
    $region48: #{tpu_custom_call.1} parent=1 // pred_region
      %s372 = ssub.s32 128, 128
      %373 = vsyncadd [#allocation4], %s372
      %s375 = sshll.u32 [#allocation10], 4
      %s376 = int_to_ptr.vmem [resolvable:$true] %s375
      %378 = dma.vmem_to_hbm [thread:$0]  %s376, 128, %s7, [#allocation4]
    $region49: #{tpu_custom_call.1} parent=1 // pred_fallthru
      _
    // Predicated region
    $region50: #{tpu_custom_call.1} parent=1 // pred_check
      _
    $region51: #{tpu_custom_call.1} parent=1 // pred_check_branch
      %380 = sbr.rel (0) target = $region53
    $region52: #{tpu_custom_call.1} parent=1 // pred_region
      %381 = dma.done [#allocation4], 128
    $region53: #{tpu_custom_call.1} parent=1 // pred_fallthru
      _
    %382 = vsyncpa [#allocation3], 1
    %383 = vsyncpa [#allocation6], 1
    %384 = vsyncpa [#allocation9], 1
    %385 = vsyncpa [#allocation4], 1

</llo_original>
